<compile_context>
chip_gen: v5e
topology: v5e:2x2
jax: 0.10.0
libtpu: 0.0.40
codegen_flags: <defaults>
</compile_context>

<pallas_src>
import functools

import jax
import jax.numpy as jnp
from jax.experimental import pallas as pl
from jax.experimental.pallas import tpu as pltpu


def _periodic_pad_kernel(x_ref, o_ref, *, p):
    # x_ref block: (Ct, H, W) ; o_ref block: (Ct, Ho, Wo) with Ho=H+2p, Wo=W+2p
    ct, H, W = x_ref.shape
    _, Ho, Wo = o_ref.shape

    x = x_ref[...]                                       # (Ct, H, W)

    # Zero top / bottom p rows (output VMEM is NOT zero-initialized).
    zrows = jnp.zeros((ct, p, Wo), dtype=x.dtype)
    o_ref[:, 0:p, :] = zrows
    o_ref[:, H + p:Ho, :] = zrows

    # Interior: plain bulk copy (biggest store, kept contiguous).
    o_ref[:, p:p + H, p:p + W] = x

    # Circular halos along W.
    o_ref[:, p:p + H, 0:p] = x[:, :, W - p:W]            # wrap: last p columns
    o_ref[:, p:p + H, W + p:Wo] = x[:, :, 0:p]           # wrap: first p columns


def _choose_block_channels(bc: int, per_channel_bytes: int,
                           target_bytes: int = 2 << 20) -> int:
    """Largest divisor of bc whose per-step tile stays near ~2 MiB.

    ~2 MiB per step (x2 for double buffering, x2 for in+out) stays well under
    the default scoped VMEM limit on all chips, including v7x (64 MiB VMEM).
    """
    ct_max = max(1, min(bc, target_bytes // max(per_channel_bytes, 1)))
    best = 1
    for d in range(1, int(ct_max) + 1):
        if bc % d == 0:
            best = d
    return best


def periodic_padding_2d(x: jax.Array, pad_width: int) -> jax.Array:
    """Pallas implementation of PeriodicPadding2D.forward for NCHW input."""
    if pad_width == 0:
        return x
    p = int(pad_width)
    B, C, H, W = x.shape
    assert p <= W, "pad_width must be <= W for circular padding along W"
    Ho, Wo = H + 2 * p, W + 2 * p

    BC = B * C
    x2 = x.reshape(BC, H, W)

    itemsize = jnp.dtype(x.dtype).itemsize
    per_channel_bytes = (H * W + Ho * Wo) * itemsize
    Ct = _choose_block_channels(BC, per_channel_bytes)
    grid = (BC // Ct,)

    bytes_accessed = (BC * H * W + BC * Ho * Wo) * itemsize

    kernel = functools.partial(_periodic_pad_kernel, p=p)

    out2 = pl.pallas_call(
        kernel,
        out_shape=jax.ShapeDtypeStruct((BC, Ho, Wo), x.dtype),
        grid_spec=pltpu.PrefetchScalarGridSpec(
            num_scalar_prefetch=0,
            grid=grid,
            in_specs=[
                # Last two dims equal full array extents -> (8,128) rule satisfied.
                pl.BlockSpec((Ct, H, W), lambda i: (i, 0, 0)),
            ],
            out_specs=pl.BlockSpec((Ct, Ho, Wo), lambda i: (i, 0, 0)),
        ),
        compiler_params=pltpu.CompilerParams(
            dimension_semantics=("parallel",),
        ),
        cost_estimate=pl.CostEstimate(
            flops=0, transcendentals=0, bytes_accessed=bytes_accessed
        ),
    )(x2)

    # TODO(synk): for models that can run NHWC with C >= 128, a channels-last
    # layout would make every store lane-dense regardless of W/pad_width.
    return out2.reshape(B, C, Ho, Wo)


def _reference(x: jax.Array, pad_width: int) -> jax.Array:
    if pad_width == 0:
        return x
    p = pad_width
    xp = jnp.concatenate([x[:, :, :, -p:], x, x[:, :, :, :p]], axis=-1)
    return jnp.pad(xp, ((0, 0), (0, 0), (p, p), (0, 0)))


if __name__ == "__main__":
    key = jax.random.PRNGKey(0)
    B, C, H, W = 2, 4, 16, 16
    pad_width = 2
    x = jax.random.normal(key, (B, C, H, W), dtype=jnp.float32)

    out = periodic_padding_2d(x, pad_width)
    out = jax.block_until_ready(out)

    ref = _reference(x, pad_width)
    assert out.shape == (B, C, H + 2 * pad_width, W + 2 * pad_width)
    assert jnp.allclose(out, ref), "Pallas output mismatch vs reference"

    print("KERNEL_OK")
</pallas_src>

<mosaic_0001>
module attributes {stable_mosaic.version = 11 : i64} {
  func.func @_periodic_pad_kernel(%arg0: i32, %arg1: memref<8x16x16xf32, #tpu.memory_space<vmem>>, %arg2: memref<8x20x20xf32, #tpu.memory_space<vmem>>) attributes {dimension_semantics = [#tpu.dimension_semantics<parallel>], iteration_bounds = array<i64: 1>, scalar_prefetch = 0 : i64, scratch_operands = 0 : i64, tpu.core_type = #tpu.core_type<tc>, window_params = [{transform_indices = @transform_0, window_bounds = array<i64: 8, 16, 16>}, {transform_indices = @transform_1, window_bounds = array<i64: 8, 20, 20>}]} {
    %c0 = arith.constant 0 : index
    %c0_0 = arith.constant 0 : index
    %c0_1 = arith.constant 0 : index
    %0 = vector.load %arg1[%c0, %c0_0, %c0_1] : memref<8x16x16xf32, #tpu.memory_space<vmem>>, vector<8x16x16xf32>
    %cst = arith.constant 0.000000e+00 : f32
    %1 = vector.broadcast %cst : f32 to vector<8x2x20xf32>
    %c0_2 = arith.constant 0 : index
    %c0_3 = arith.constant 0 : index
    %c0_4 = arith.constant 0 : index
    %2 = vector.load %arg2[%c0_2, %c0_3, %c0_4] : memref<8x20x20xf32, #tpu.memory_space<vmem>>, vector<8x2x20xf32>
    tpu.vector_store %arg2[%c0_2, %c0_3, %c0_4], %1 {strides = array<i32>} : memref<8x20x20xf32, #tpu.memory_space<vmem>>, vector<8x2x20xf32>,
    %c0_5 = arith.constant 0 : index
    %c18 = arith.constant 18 : index
    %c0_6 = arith.constant 0 : index
    %3 = vector.load %arg2[%c0_5, %c18, %c0_6] : memref<8x20x20xf32, #tpu.memory_space<vmem>>, vector<8x2x20xf32>
    tpu.vector_store %arg2[%c0_5, %c18, %c0_6], %1 {strides = array<i32>} : memref<8x20x20xf32, #tpu.memory_space<vmem>>, vector<8x2x20xf32>,
    %c0_7 = arith.constant 0 : index
    %c2 = arith.constant 2 : index
    %c2_8 = arith.constant 2 : index
    %4 = vector.load %arg2[%c0_7, %c2, %c2_8] : memref<8x20x20xf32, #tpu.memory_space<vmem>>, vector<8x16x16xf32>
    tpu.vector_store %arg2[%c0_7, %c2, %c2_8], %0 {strides = array<i32>} : memref<8x20x20xf32, #tpu.memory_space<vmem>>, vector<8x16x16xf32>,
    %5 = vector.extract_strided_slice %0 {offsets = [0, 0, 14], sizes = [8, 16, 2], strides = [1, 1, 1]} : vector<8x16x16xf32> to vector<8x16x2xf32>
    %c0_9 = arith.constant 0 : index
    %c2_10 = arith.constant 2 : index
    %c0_11 = arith.constant 0 : index
    %6 = vector.load %arg2[%c0_9, %c2_10, %c0_11] : memref<8x20x20xf32, #tpu.memory_space<vmem>>, vector<8x16x2xf32>
    tpu.vector_store %arg2[%c0_9, %c2_10, %c0_11], %5 {strides = array<i32>} : memref<8x20x20xf32, #tpu.memory_space<vmem>>, vector<8x16x2xf32>,
    %7 = vector.extract_strided_slice %0 {offsets = [0, 0, 0], sizes = [8, 16, 2], strides = [1, 1, 1]} : vector<8x16x16xf32> to vector<8x16x2xf32>
    %c0_12 = arith.constant 0 : index
    %c2_13 = arith.constant 2 : index
    %c18_14 = arith.constant 18 : index
    %8 = vector.load %arg2[%c0_12, %c2_13, %c18_14] : memref<8x20x20xf32, #tpu.memory_space<vmem>>, vector<8x16x2xf32>
    tpu.vector_store %arg2[%c0_12, %c2_13, %c18_14], %7 {strides = array<i32>} : memref<8x20x20xf32, #tpu.memory_space<vmem>>, vector<8x16x2xf32>,
    return
  }
  func.func @transform_0(%arg0: i32) -> (i32, i32, i32) {
    %c0_i32 = arith.constant 0 : i32
    %c0_i32_0 = arith.constant 0 : i32
    %c0_i32_1 = arith.constant 0 : i32
    return %arg0, %c0_i32, %c0_i32_0 : i32, i32, i32
  }
  func.func @transform_1(%arg0: i32) -> (i32, i32, i32) {
    %c0_i32 = arith.constant 0 : i32
    %c0_i32_0 = arith.constant 0 : i32
    %c0_i32_1 = arith.constant 0 : i32
    return %arg0, %c0_i32, %c0_i32_0 : i32, i32, i32
  }
}

</mosaic_0001>

<llo_original>
// kernel: tpu_custom_call.1
$region0: #{tpu_custom_call.1}
  #allocation0 [shape = 'u32[]', space=smem, size = 0x4, offset = 0x4, fixed_abs, tag = 'smem constant byte address 0x4 - core index']
  #allocation1 [shape = 'u32[72,128]{1,0:T(1,128)}', space=vmem, size = 0x9000, scoped, tag = 'internal scratch']
  %s0 = inlined_call_operand.hbm [shape: f32[8,16,16], index: 0, kind: input, shape index: {}]
  %s1 = inlined_call_operand.vmem [shape: f32[8,20,20], index: 1, kind: output, shape index: {}]
  %s2 = sld [smem:[#allocation0]]
  $region18: #{tpu_custom_call.1} parent=0
    _
  %s4 = ssub.s32 1, %s2
  %s5 = scalar_select 0, %s4, %s2
  $region1: #{tpu_custom_call.1} parent=0
    #allocation2 [shape = 'u8[65536]{0}', space=vmem, size = 0x10000, scoped, tag = 'input window, operand 0, single buffered']
    #allocation3 [shape = 's32[1]{0}', space=sflag, size = 0x4, scoped, tag = 'scoped memory for tpu_custom_call.1']
    %6 = vsyncpa [#allocation3], 0
    // Predicated region
    $region2: #{tpu_custom_call.1} parent=1 // pred_check
      _
    $region3: #{tpu_custom_call.1} parent=1 // pred_check_branch
      %8 = sbr.rel (0) target = $region5
    $region4: #{tpu_custom_call.1} parent=1 // pred_region
      %10 = vsyncadd [#allocation3], 0
      %s11 = sshll.u32 %s0, 4
      %s12 = int_to_ptr.hbm [resolvable:$true] %s11
      %s13 = sshll.u32 [#allocation2], 4
      %s14 = int_to_ptr.vmem [resolvable:$true] %s13
      %19 = dma.hbm_to_vmem [thread:$0]  %s12, 2048, %s14, [#allocation3], 128, 128, 8
    $region5: #{tpu_custom_call.1} parent=1 // pred_fallthru
      _
    // Predicated region
    $region6: #{tpu_custom_call.1} parent=1 // pred_check
      _
    $region7: #{tpu_custom_call.1} parent=1 // pred_check_branch
      %21 = sbr.rel (0) target = $region9
    $region8: #{tpu_custom_call.1} parent=1 // pred_region
      %23 = dma.done [#allocation3], 2048
    $region9: #{tpu_custom_call.1} parent=1 // pred_fallthru
      _
    %v24 = vld [vmem:[#allocation2] sm:$0xff]
    %v25 = vld [vmem:[#allocation2 + $0x8] sm:$0xff]
    %v26 = vld [vmem:[#allocation2 + $0x10] sm:$0xff]
    %v27 = vld [vmem:[#allocation2 + $0x18] sm:$0xff]
    %v28 = vld [vmem:[#allocation2 + $0x20] sm:$0xff]
    %v29 = vld [vmem:[#allocation2 + $0x28] sm:$0xff]
    %v30 = vld [vmem:[#allocation2 + $0x30] sm:$0xff]
    %v31 = vld [vmem:[#allocation2 + $0x38] sm:$0xff]
    %v32 = vld [vmem:[#allocation2 + $0x40] sm:$0xff]
    %v33 = vld [vmem:[#allocation2 + $0x48] sm:$0xff]
    %v34 = vld [vmem:[#allocation2 + $0x50] sm:$0xff]
    %v35 = vld [vmem:[#allocation2 + $0x58] sm:$0xff]
    %v36 = vld [vmem:[#allocation2 + $0x60] sm:$0xff]
    %v37 = vld [vmem:[#allocation2 + $0x68] sm:$0xff]
    %v38 = vld [vmem:[#allocation2 + $0x70] sm:$0xff]
    %v39 = vld [vmem:[#allocation2 + $0x78] sm:$0xff]
    %vm40 = vcmask 156672
    %41 = vst.msk [vmem:[%s1] sm:$0x3] %vm40, 0.0
    %42 = vst.msk [vmem:[%s1 + $0x18] sm:$0x3] %vm40, 0.0
    %43 = vst.msk [vmem:[%s1 + $0x30] sm:$0x3] %vm40, 0.0
    %44 = vst.msk [vmem:[%s1 + $0x48] sm:$0x3] %vm40, 0.0
    %45 = vst.msk [vmem:[%s1 + $0x60] sm:$0x3] %vm40, 0.0
    %46 = vst.msk [vmem:[%s1 + $0x78] sm:$0x3] %vm40, 0.0
    %47 = vst.msk [vmem:[%s1 + $0x90] sm:$0x3] %vm40, 0.0
    %48 = vst.msk [vmem:[%s1 + $0xa8] sm:$0x3] %vm40, 0.0
    %49 = vst.msk [vmem:[%s1 + $0x12] sm:$0x3] %vm40, 0.0
    %50 = vst.msk [vmem:[%s1 + $0x2a] sm:$0x3] %vm40, 0.0
    %51 = vst.msk [vmem:[%s1 + $0x42] sm:$0x3] %vm40, 0.0
    %52 = vst.msk [vmem:[%s1 + $0x5a] sm:$0x3] %vm40, 0.0
    %53 = vst.msk [vmem:[%s1 + $0x72] sm:$0x3] %vm40, 0.0
    %54 = vst.msk [vmem:[%s1 + $0x8a] sm:$0x3] %vm40, 0.0
    %55 = vst.msk [vmem:[%s1 + $0xa2] sm:$0x3] %vm40, 0.0
    %56 = vst.msk [vmem:[%s1 + $0xba] sm:$0x3] %vm40, 0.0
    %73 = vrot.lane.b32.xlu0 %v24, 2
    %v74 = vpop.permute.xlu0 %73
    %75 = vrot.lane.b32.xlu0 %v25, 2
    %v76 = vpop.permute.xlu0 %75
    %77 = vrot.lane.b32.xlu0 %v26, 2
    %v78 = vpop.permute.xlu0 %77
    %79 = vrot.lane.b32.xlu0 %v27, 2
    %v80 = vpop.permute.xlu0 %79
    %81 = vrot.lane.b32.xlu0 %v28, 2
    %v82 = vpop.permute.xlu0 %81
    %83 = vrot.lane.b32.xlu0 %v29, 2
    %v84 = vpop.permute.xlu0 %83
    %85 = vrot.lane.b32.xlu0 %v30, 2
    %v86 = vpop.permute.xlu0 %85
    %87 = vrot.lane.b32.xlu0 %v31, 2
    %v88 = vpop.permute.xlu0 %87
    %89 = vrot.lane.b32.xlu0 %v32, 2
    %v90 = vpop.permute.xlu0 %89
    %91 = vrot.lane.b32.xlu0 %v33, 2
    %v92 = vpop.permute.xlu0 %91
    %93 = vrot.lane.b32.xlu0 %v34, 2
    %v94 = vpop.permute.xlu0 %93
    %95 = vrot.lane.b32.xlu0 %v35, 2
    %v96 = vpop.permute.xlu0 %95
    %97 = vrot.lane.b32.xlu0 %v36, 2
    %v98 = vpop.permute.xlu0 %97
    %99 = vrot.lane.b32.xlu0 %v37, 2
    %v100 = vpop.permute.xlu0 %99
    %101 = vrot.lane.b32.xlu0 %v38, 2
    %v102 = vpop.permute.xlu0 %101
    %103 = vrot.lane.b32.xlu0 %v39, 2
    %v104 = vpop.permute.xlu0 %103
    %vm121 = vcmask 146448
    %122 = vst.msk [vmem:[%s1 + $0x2] sm:$0xff] %vm121, %v74
    %123 = vst.msk [vmem:[%s1 + $0xa] sm:$0xff] %vm121, %v76
    %124 = vst.msk [vmem:[%s1 + $0x1a] sm:$0xff] %vm121, %v78
    %125 = vst.msk [vmem:[%s1 + $0x22] sm:$0xff] %vm121, %v80
    %126 = vst.msk [vmem:[%s1 + $0x32] sm:$0xff] %vm121, %v82
    %127 = vst.msk [vmem:[%s1 + $0x3a] sm:$0xff] %vm121, %v84
    %128 = vst.msk [vmem:[%s1 + $0x4a] sm:$0xff] %vm121, %v86
    %129 = vst.msk [vmem:[%s1 + $0x52] sm:$0xff] %vm121, %v88
    %130 = vst.msk [vmem:[%s1 + $0x62] sm:$0xff] %vm121, %v90
    %131 = vst.msk [vmem:[%s1 + $0x6a] sm:$0xff] %vm121, %v92
    %132 = vst.msk [vmem:[%s1 + $0x7a] sm:$0xff] %vm121, %v94
    %133 = vst.msk [vmem:[%s1 + $0x82] sm:$0xff] %vm121, %v96
    %134 = vst.msk [vmem:[%s1 + $0x92] sm:$0xff] %vm121, %v98
    %135 = vst.msk [vmem:[%s1 + $0x9a] sm:$0xff] %vm121, %v100
    %136 = vst.msk [vmem:[%s1 + $0xaa] sm:$0xff] %vm121, %v102
    %137 = vst.msk [vmem:[%s1 + $0xb2] sm:$0xff] %vm121, %v104
    %138 = vrot.lane.b32.xlu0 %v24, 114
    %v139 = vpop.permute.xlu0 %138
    %140 = vrot.lane.b32.xlu0 %v25, 114
    %v141 = vpop.permute.xlu0 %140
    %142 = vrot.lane.b32.xlu0 %v26, 114
    %v143 = vpop.permute.xlu0 %142
    %144 = vrot.lane.b32.xlu0 %v27, 114
    %v145 = vpop.permute.xlu0 %144
    %146 = vrot.lane.b32.xlu0 %v28, 114
    %v147 = vpop.permute.xlu0 %146
    %148 = vrot.lane.b32.xlu0 %v29, 114
    %v149 = vpop.permute.xlu0 %148
    %150 = vrot.lane.b32.xlu0 %v30, 114
    %v151 = vpop.permute.xlu0 %150
    %152 = vrot.lane.b32.xlu0 %v31, 114
    %v153 = vpop.permute.xlu0 %152
    %154 = vrot.lane.b32.xlu0 %v32, 114
    %v155 = vpop.permute.xlu0 %154
    %156 = vrot.lane.b32.xlu0 %v33, 114
    %v157 = vpop.permute.xlu0 %156
    %158 = vrot.lane.b32.xlu0 %v34, 114
    %v159 = vpop.permute.xlu0 %158
    %160 = vrot.lane.b32.xlu0 %v35, 114
    %v161 = vpop.permute.xlu0 %160
    %162 = vrot.lane.b32.xlu0 %v36, 114
    %v163 = vpop.permute.xlu0 %162
    %164 = vrot.lane.b32.xlu0 %v37, 114
    %v165 = vpop.permute.xlu0 %164
    %166 = vrot.lane.b32.xlu0 %v38, 114
    %v167 = vpop.permute.xlu0 %166
    %168 = vrot.lane.b32.xlu0 %v39, 114
    %v169 = vpop.permute.xlu0 %168
    %vm186 = vcmask 15360
    %187 = vst.msk [vmem:[%s1 + $0x2] sm:$0xff] %vm186, %v139
    %188 = vst.msk [vmem:[%s1 + $0xa] sm:$0xff] %vm186, %v141
    %189 = vst.msk [vmem:[%s1 + $0x1a] sm:$0xff] %vm186, %v143
    %190 = vst.msk [vmem:[%s1 + $0x22] sm:$0xff] %vm186, %v145
    %191 = vst.msk [vmem:[%s1 + $0x32] sm:$0xff] %vm186, %v147
    %192 = vst.msk [vmem:[%s1 + $0x3a] sm:$0xff] %vm186, %v149
    %193 = vst.msk [vmem:[%s1 + $0x4a] sm:$0xff] %vm186, %v151
    %194 = vst.msk [vmem:[%s1 + $0x52] sm:$0xff] %vm186, %v153
    %195 = vst.msk [vmem:[%s1 + $0x62] sm:$0xff] %vm186, %v155
    %196 = vst.msk [vmem:[%s1 + $0x6a] sm:$0xff] %vm186, %v157
    %197 = vst.msk [vmem:[%s1 + $0x7a] sm:$0xff] %vm186, %v159
    %198 = vst.msk [vmem:[%s1 + $0x82] sm:$0xff] %vm186, %v161
    %199 = vst.msk [vmem:[%s1 + $0x92] sm:$0xff] %vm186, %v163
    %200 = vst.msk [vmem:[%s1 + $0x9a] sm:$0xff] %vm186, %v165
    %201 = vst.msk [vmem:[%s1 + $0xaa] sm:$0xff] %vm186, %v167
    %202 = vst.msk [vmem:[%s1 + $0xb2] sm:$0xff] %vm186, %v169
    %203 = vrot.lane.b32.xlu0 %v24, 18
    %v204 = vpop.permute.xlu0 %203
    %205 = vrot.lane.b32.xlu0 %v25, 18
    %v206 = vpop.permute.xlu0 %205
    %207 = vrot.lane.b32.xlu0 %v26, 18
    %v208 = vpop.permute.xlu0 %207
    %209 = vrot.lane.b32.xlu0 %v27, 18
    %v210 = vpop.permute.xlu0 %209
    %211 = vrot.lane.b32.xlu0 %v28, 18
    %v212 = vpop.permute.xlu0 %211
    %213 = vrot.lane.b32.xlu0 %v29, 18
    %v214 = vpop.permute.xlu0 %213
    %215 = vrot.lane.b32.xlu0 %v30, 18
    %v216 = vpop.permute.xlu0 %215
    %217 = vrot.lane.b32.xlu0 %v31, 18
    %v218 = vpop.permute.xlu0 %217
    %219 = vrot.lane.b32.xlu0 %v32, 18
    %v220 = vpop.permute.xlu0 %219
    %221 = vrot.lane.b32.xlu0 %v33, 18
    %v222 = vpop.permute.xlu0 %221
    %223 = vrot.lane.b32.xlu0 %v34, 18
    %v224 = vpop.permute.xlu0 %223
    %225 = vrot.lane.b32.xlu0 %v35, 18
    %v226 = vpop.permute.xlu0 %225
    %227 = vrot.lane.b32.xlu0 %v36, 18
    %v228 = vpop.permute.xlu0 %227
    %229 = vrot.lane.b32.xlu0 %v37, 18
    %v230 = vpop.permute.xlu0 %229
    %231 = vrot.lane.b32.xlu0 %v38, 18
    %v232 = vpop.permute.xlu0 %231
    %233 = vrot.lane.b32.xlu0 %v39, 18
    %v234 = vpop.permute.xlu0 %233
    %vm251 = vcmask 162960
    %252 = vst.msk [vmem:[%s1 + $0x2] sm:$0xff] %vm251, %v204
    %253 = vst.msk [vmem:[%s1 + $0xa] sm:$0xff] %vm251, %v206
    %254 = vst.msk [vmem:[%s1 + $0x1a] sm:$0xff] %vm251, %v208
    %255 = vst.msk [vmem:[%s1 + $0x22] sm:$0xff] %vm251, %v210
    %256 = vst.msk [vmem:[%s1 + $0x32] sm:$0xff] %vm251, %v212
    %257 = vst.msk [vmem:[%s1 + $0x3a] sm:$0xff] %vm251, %v214
    %258 = vst.msk [vmem:[%s1 + $0x4a] sm:$0xff] %vm251, %v216
    %259 = vst.msk [vmem:[%s1 + $0x52] sm:$0xff] %vm251, %v218
    %260 = vst.msk [vmem:[%s1 + $0x62] sm:$0xff] %vm251, %v220
    %261 = vst.msk [vmem:[%s1 + $0x6a] sm:$0xff] %vm251, %v222
    %262 = vst.msk [vmem:[%s1 + $0x7a] sm:$0xff] %vm251, %v224
    %263 = vst.msk [vmem:[%s1 + $0x82] sm:$0xff] %vm251, %v226
    %264 = vst.msk [vmem:[%s1 + $0x92] sm:$0xff] %vm251, %v228
    %265 = vst.msk [vmem:[%s1 + $0x9a] sm:$0xff] %vm251, %v230
    %266 = vst.msk [vmem:[%s1 + $0xaa] sm:$0xff] %vm251, %v232
    %267 = vst.msk [vmem:[%s1 + $0xb2] sm:$0xff] %vm251, %v234
    // Predicated region
    $region10: #{tpu_custom_call.1} parent=1 // pred_check
      _
    $region11: #{tpu_custom_call.1} parent=1 // pred_check_branch
      %269 = sbr.rel (0) target = $region13
    $region12: #{tpu_custom_call.1} parent=1 // pred_region
      _
    $region13: #{tpu_custom_call.1} parent=1 // pred_fallthru
      _
    // Predicated region
    $region14: #{tpu_custom_call.1} parent=1 // pred_check
      _
    $region15: #{tpu_custom_call.1} parent=1 // pred_check_branch
      %271 = sbr.rel (0) target = $region17
    $region16: #{tpu_custom_call.1} parent=1 // pred_region
      _
    $region17: #{tpu_custom_call.1} parent=1 // pred_fallthru
      _
    %272 = vsyncpa [#allocation3], 1

</llo_original>
